<compile_context>
chip_gen: v6e
topology: v6e:2x2x1
jax: 0.10.0
libtpu: 0.0.40
codegen_flags: <defaults>
</compile_context>

<pallas_src>
import jax
import jax.numpy as jnp
from jax.experimental import pallas as pl
from jax.experimental.pallas import tpu as pltpu

IN_FEATURES = 76
HIDDEN = 32
TB_MAX = 4096  # rows per batch tile; ~12 MiB working set, fits all chips with 32 MiB scoped VMEM


def _mlp_kernel(x_ref, w1_ref, b1_ref, w2_ref, b2_ref, o_ref):
    # f32 x tile streamed from HBM; cast to bf16 here (free under the DMA).
    x_bf = x_ref[...].astype(jnp.bfloat16)
    # Layer 1: bf16 x bf16 MXU matmul, f32 accumulation.
    h = jnp.dot(x_bf, w1_ref[...], preferred_element_type=jnp.float32)
    h = jnp.maximum(h + b1_ref[...], 0.0)  # bias + ReLU on the VPU
    # Layer 2: tiny K=32 matmul, also bf16 x bf16 on the MXU, f32 accumulation.
    out = jnp.dot(h.astype(jnp.bfloat16), w2_ref[...],
                  preferred_element_type=jnp.float32)
    o_ref[...] = (out + b2_ref[...]).astype(o_ref.dtype)


def _round_up(n, m):
    return ((n + m - 1) // m) * m


def _choose_tb(B, x_dtype):
    """Batch tile size: >=2 grid tiles when possible (v7x megacore), capped
    for VMEM, rounded to the sublane granularity of the x dtype."""
    sub = 16 if jnp.dtype(x_dtype).itemsize < 4 else 8
    tb = _round_up(pl.cdiv(B, 2), 16)       # aim for at least 2 tiles
    tb = min(tb, TB_MAX)                    # VMEM cap (v5e/v7x safe)
    tb = min(tb, _round_up(B, sub))         # never exceed the padded batch
    return max(tb, sub)


def classifier_forward(x, w1, b1, w2, b2, out_dtype=jnp.float32):
    """Fused MLP matching the PyTorch module's forward.

    x may have any leading shape; it is flattened to (-1, 76) like
    `x.view(-1, 76)`.  Weights are stored as [in, out] (PyTorch W.T) so the
    kernel computes y = x @ W + b directly.
    """
    total = 1
    for d in x.shape:
        total *= d
    assert total % IN_FEATURES == 0, "input element count must be divisible by 76"
    x2d = x.reshape(-1, IN_FEATURES)  # kept in its native dtype (f32): no wrapper cast
    B = x2d.shape[0]
    n_labels = w2.shape[1]

    # Weights are tiny -> cast once on the host side; resident in VMEM.
    w1_bf = w1.astype(jnp.bfloat16)
    w2_bf = w2.astype(jnp.bfloat16)
    b1_2d = b1.reshape(1, HIDDEN).astype(jnp.float32)
    b2_2d = b2.reshape(1, n_labels).astype(jnp.float32)

    tb = _choose_tb(B, x2d.dtype)
    grid = (pl.cdiv(B, tb),)

    x_bytes = x2d.dtype.itemsize
    out_bytes = jnp.dtype(out_dtype).itemsize
    cost = pl.CostEstimate(
        flops=2 * B * (IN_FEATURES * HIDDEN + HIDDEN * n_labels),
        transcendentals=0,
        bytes_accessed=(
            B * (IN_FEATURES * x_bytes + n_labels * out_bytes)  # x read + out write
            + IN_FEATURES * HIDDEN * 2                          # w1 (bf16)
            + HIDDEN * n_labels * 2                             # w2 (bf16)
            + (HIDDEN + n_labels) * 4                           # biases (f32)
        ),
    )

    return pl.pallas_call(
        _mlp_kernel,
        out_shape=jax.ShapeDtypeStruct((B, n_labels), out_dtype),
        grid=grid,
        in_specs=[
            pl.BlockSpec((tb, IN_FEATURES), lambda i: (i, 0)),      # x: streamed per tile
            pl.BlockSpec((IN_FEATURES, HIDDEN), lambda i: (0, 0)),  # w1: VMEM-resident
            pl.BlockSpec((1, HIDDEN), lambda i: (0, 0)),            # b1
            pl.BlockSpec((HIDDEN, n_labels), lambda i: (0, 0)),     # w2
            pl.BlockSpec((1, n_labels), lambda i: (0, 0)),          # b2
        ],
        out_specs=pl.BlockSpec((tb, n_labels), lambda i: (i, 0)),
        compiler_params=pltpu.CompilerParams(
            dimension_semantics=("parallel",),   # shard batch tiles across TCs on v7x
            vmem_limit_bytes=32 * 1024 * 1024,   # explicit headroom (safe on v5e/v6e/v7x)
        ),
        cost_estimate=cost,
    )(x2d, w1_bf, b1_2d, w2_bf, b2_2d)


def init_params(key, n_labels):
    """Deterministic synthetic parameters matching nn.Linear shapes ([in, out])."""
    k1, k2, k3, k4 = jax.random.split(key, 4)
    lim1 = 1.0 / (IN_FEATURES ** 0.5)
    lim2 = 1.0 / (HIDDEN ** 0.5)
    w1 = jax.random.uniform(k1, (IN_FEATURES, HIDDEN), jnp.float32, -lim1, lim1)
    b1 = jax.random.uniform(k2, (HIDDEN,), jnp.float32, -lim1, lim1)
    w2 = jax.random.uniform(k3, (HIDDEN, n_labels), jnp.float32, -lim2, lim2)
    b2 = jax.random.uniform(k4, (n_labels,), jnp.float32, -lim2, lim2)
    return w1, b1, w2, b2


if __name__ == "__main__":
    key = jax.random.PRNGKey(0)
    k_x, k_p = jax.random.split(key)

    n_labels = 10
    # Small input; forward flattens to (-1, 76): (2, 4, 76) -> (8, 76).
    x = jax.random.normal(k_x, (2, 4, 76), jnp.float32)

    w1, b1, w2, b2 = init_params(k_p, n_labels)

    out = classifier_forward(x, w1, b1, w2, b2)
    out = jax.block_until_ready(out)

    # Reference (plain JAX) with the same bf16 quantization contract as the kernel.
    hp = jax.lax.Precision.HIGHEST
    x2d = x.reshape(-1, IN_FEATURES)
    x_q = x2d.astype(jnp.bfloat16).astype(jnp.float32)
    w1_q = w1.astype(jnp.bfloat16).astype(jnp.float32)
    w2_q = w2.astype(jnp.bfloat16).astype(jnp.float32)
    h_ref = jnp.maximum(jnp.dot(x_q, w1_q, precision=hp) + b1, 0.0)
    h_q = h_ref.astype(jnp.bfloat16).astype(jnp.float32)
    ref = jnp.dot(h_q, w2_q, precision=hp) + b2

    assert out.shape == (8, n_labels)
    assert jnp.allclose(out, ref, atol=2e-2, rtol=2e-2), (
        f"max abs err = {jnp.max(jnp.abs(out - ref))}"
    )

    print("KERNEL_OK")
</pallas_src>

<mosaic_0001>
module attributes {stable_mosaic.version = 11 : i64} {
  func.func @_mlp_kernel(%arg0: i32, %arg1: memref<8x76xf32, #tpu.memory_space<vmem>>, %arg2: memref<76x32xbf16, #tpu.memory_space<vmem>>, %arg3: memref<1x32xf32, #tpu.memory_space<vmem>>, %arg4: memref<32x10xbf16, #tpu.memory_space<vmem>>, %arg5: memref<1x10xf32, #tpu.memory_space<vmem>>, %arg6: memref<8x10xf32, #tpu.memory_space<vmem>>) attributes {dimension_semantics = [#tpu.dimension_semantics<parallel>], iteration_bounds = array<i64: 1>, scalar_prefetch = 0 : i64, scratch_operands = 0 : i64, tpu.core_type = #tpu.core_type<tc>, window_params = [{transform_indices = @transform_0, window_bounds = array<i64: 8, 76>}, {pipeline_mode = #tpu.pipeline_mode<synchronous>, transform_indices = @transform_1, window_bounds = array<i64: 76, 32>}, {pipeline_mode = #tpu.pipeline_mode<synchronous>, transform_indices = @transform_2, window_bounds = array<i64: 1, 32>}, {pipeline_mode = #tpu.pipeline_mode<synchronous>, transform_indices = @transform_3, window_bounds = array<i64: 32, 10>}, {pipeline_mode = #tpu.pipeline_mode<synchronous>, transform_indices = @transform_4, window_bounds = array<i64: 1, 10>}, {transform_indices = @transform_5, window_bounds = array<i64: 8, 10>}]} {
    %c0 = arith.constant 0 : index
    %c0_0 = arith.constant 0 : index
    %0 = vector.load %arg1[%c0, %c0_0] : memref<8x76xf32, #tpu.memory_space<vmem>>, vector<8x76xf32>
    %1 = arith.truncf %0 : vector<8x76xf32> to vector<8x76xbf16>
    %c0_1 = arith.constant 0 : index
    %c0_2 = arith.constant 0 : index
    %2 = vector.load %arg2[%c0_1, %c0_2] : memref<76x32xbf16, #tpu.memory_space<vmem>>, vector<76x32xbf16>
    %cst = arith.constant dense<0.000000e+00> : vector<8x32xf32>
    %3 = tpu.matmul %1, %2, %cst {dimension_numbers = #tpu.dot_dimension_numbers<[1], [0], [0], [1], [0, 0, 1, 1], [], []>} : vector<8x76xbf16>, vector<76x32xbf16>, vector<8x32xf32> -> vector<8x32xf32>
    %c0_3 = arith.constant 0 : index
    %c0_4 = arith.constant 0 : index
    %4 = vector.load %arg3[%c0_3, %c0_4] : memref<1x32xf32, #tpu.memory_space<vmem>>, vector<1x32xf32>
    %5 = vector.broadcast %4 : vector<1x32xf32> to vector<8x32xf32>
    %6 = arith.addf %3, %5 : vector<8x32xf32>
    %cst_5 = arith.constant 0.000000e+00 : f32
    %7 = vector.broadcast %cst_5 : f32 to vector<8x32xf32>
    %8 = arith.maximumf %6, %7 : vector<8x32xf32>
    %9 = arith.truncf %8 : vector<8x32xf32> to vector<8x32xbf16>
    %c0_6 = arith.constant 0 : index
    %c0_7 = arith.constant 0 : index
    %10 = vector.load %arg4[%c0_6, %c0_7] : memref<32x10xbf16, #tpu.memory_space<vmem>>, vector<32x10xbf16>
    %cst_8 = arith.constant dense<0.000000e+00> : vector<8x10xf32>
    %11 = tpu.matmul %9, %10, %cst_8 {dimension_numbers = #tpu.dot_dimension_numbers<[1], [0], [0], [1], [0, 0, 1, 1], [], []>} : vector<8x32xbf16>, vector<32x10xbf16>, vector<8x10xf32> -> vector<8x10xf32>
    %c0_9 = arith.constant 0 : index
    %c0_10 = arith.constant 0 : index
    %12 = vector.load %arg5[%c0_9, %c0_10] : memref<1x10xf32, #tpu.memory_space<vmem>>, vector<1x10xf32>
    %13 = vector.broadcast %12 : vector<1x10xf32> to vector<8x10xf32>
    %14 = arith.addf %11, %13 : vector<8x10xf32>
    %c0_11 = arith.constant 0 : index
    %c0_12 = arith.constant 0 : index
    %15 = vector.load %arg6[%c0_11, %c0_12] : memref<8x10xf32, #tpu.memory_space<vmem>>, vector<8x10xf32>
    tpu.vector_store %arg6[%c0_11, %c0_12], %14 {strides = array<i32>} : memref<8x10xf32, #tpu.memory_space<vmem>>, vector<8x10xf32>,
    return
  }
  func.func @transform_0(%arg0: i32) -> (i32, i32) {
    %c0_i32 = arith.constant 0 : i32
    %c0_i32_0 = arith.constant 0 : i32
    return %arg0, %c0_i32 : i32, i32
  }
  func.func @transform_1(%arg0: i32) -> (i32, i32) {
    %c0_i32 = arith.constant 0 : i32
    %c0_i32_0 = arith.constant 0 : i32
    %c0_i32_1 = arith.constant 0 : i32
    return %c0_i32, %c0_i32_0 : i32, i32
  }
  func.func @transform_2(%arg0: i32) -> (i32, i32) {
    %c0_i32 = arith.constant 0 : i32
    %c0_i32_0 = arith.constant 0 : i32
    %c0_i32_1 = arith.constant 0 : i32
    return %c0_i32, %c0_i32_0 : i32, i32
  }
  func.func @transform_3(%arg0: i32) -> (i32, i32) {
    %c0_i32 = arith.constant 0 : i32
    %c0_i32_0 = arith.constant 0 : i32
    %c0_i32_1 = arith.constant 0 : i32
    return %c0_i32, %c0_i32_0 : i32, i32
  }
  func.func @transform_4(%arg0: i32) -> (i32, i32) {
    %c0_i32 = arith.constant 0 : i32
    %c0_i32_0 = arith.constant 0 : i32
    %c0_i32_1 = arith.constant 0 : i32
    return %c0_i32, %c0_i32_0 : i32, i32
  }
  func.func @transform_5(%arg0: i32) -> (i32, i32) {
    %c0_i32 = arith.constant 0 : i32
    %c0_i32_0 = arith.constant 0 : i32
    return %arg0, %c0_i32 : i32, i32
  }
}

</mosaic_0001>

<llo_original>
// kernel: tpu_custom_call.1
$region0: #{tpu_custom_call.1}
  #allocation0 [shape = 'u32[]', space=smem, size = 0x4, offset = 0x4, fixed_abs, tag = 'smem constant byte address 0x4 - core index']
  #allocation1 [shape = 'u32[144,128]{1,0:T(1,128)}', space=vmem, size = 0x12000, scoped, tag = 'internal scratch']
  %s0 = inlined_call_operand.vmem [shape: f32[8,76], index: 0, kind: input, shape index: {}]
  %s1 = inlined_call_operand.vmem [shape: bf16[76,32], index: 1, kind: input, shape index: {}]
  %s2 = inlined_call_operand.vmem [shape: f32[1,32], index: 2, kind: input, shape index: {}]
  %s3 = inlined_call_operand.vmem [shape: bf16[32,10], index: 3, kind: input, shape index: {}]
  %s4 = inlined_call_operand.vmem [shape: f32[1,10], index: 4, kind: input, shape index: {}]
  %s5 = inlined_call_operand.hbm [shape: f32[8,10], index: 5, kind: output, shape index: {}]
  %s6 = sld [smem:[#allocation0]]
  $region30: #{tpu_custom_call.1} parent=0
    _
  %s8 = ssub.s32 1, %s6
  %s9 = scalar_select 0, %s8, %s6
  $region1: #{tpu_custom_call.1} parent=0
    #allocation2 [shape = 'u8[4096]{0}', space=vmem, size = 0x1000, scoped, tag = 'output window, operand 0, single buffered']
    #allocation3 [shape = 's32[1]{0}', space=sflag, size = 0x4, scoped, tag = 'scoped memory for tpu_custom_call.1']
    %10 = vsyncpa [#allocation3], 0
    // Predicated region
    $region2: #{tpu_custom_call.1} parent=1 // pred_check
      _
    $region3: #{tpu_custom_call.1} parent=1 // pred_check_branch
      %12 = sbr.rel (0) target = $region5
    $region4: #{tpu_custom_call.1} parent=1 // pred_region
      _
    $region5: #{tpu_custom_call.1} parent=1 // pred_fallthru
      _
    // Predicated region
    $region6: #{tpu_custom_call.1} parent=1 // pred_check
      _
    $region7: #{tpu_custom_call.1} parent=1 // pred_check_branch
      %14 = sbr.rel (0) target = $region9
    $region8: #{tpu_custom_call.1} parent=1 // pred_region
      _
    $region9: #{tpu_custom_call.1} parent=1 // pred_fallthru
      _
    // Predicated region
    $region10: #{tpu_custom_call.1} parent=1 // pred_check
      _
    $region11: #{tpu_custom_call.1} parent=1 // pred_check_branch
      %16 = sbr.rel (0) target = $region13
    $region12: #{tpu_custom_call.1} parent=1 // pred_region
      _
    $region13: #{tpu_custom_call.1} parent=1 // pred_fallthru
      _
    // Predicated region
    $region14: #{tpu_custom_call.1} parent=1 // pred_check
      _
    $region15: #{tpu_custom_call.1} parent=1 // pred_check_branch
      %18 = sbr.rel (0) target = $region17
    $region16: #{tpu_custom_call.1} parent=1 // pred_region
      _
    $region17: #{tpu_custom_call.1} parent=1 // pred_fallthru
      _
    // Predicated region
    $region18: #{tpu_custom_call.1} parent=1 // pred_check
      _
    $region19: #{tpu_custom_call.1} parent=1 // pred_check_branch
      %20 = sbr.rel (0) target = $region21
    $region20: #{tpu_custom_call.1} parent=1 // pred_region
      _
    $region21: #{tpu_custom_call.1} parent=1 // pred_fallthru
      _
    %v22 = vld [vmem:[%s0] sm:$0xff]
    %v23 = vpack.c.bf16 %v22, %v22
    %v24 = vld [vmem:[%s1] sm:$0xf]
    %v25 = vld [vmem:[%s1 + $0x4] sm:$0xf]
    %v26 = vld [vmem:[%s1 + $0x8] sm:$0xf]
    %v27 = vld [vmem:[%s1 + $0xc] sm:$0xf]
    %v28 = vld [vmem:[%s1 + $0x10] sm:$0xf]
    %v29 = vld [vmem:[%s1 + $0x14] sm:$0xf]
    %v30 = vld [vmem:[%s1 + $0x18] sm:$0xf]
    %v31 = vld [vmem:[%s1 + $0x1c] sm:$0xf]
    %v32 = vld [vmem:[%s1 + $0x20] sm:$0xf]
    %v33 = vld [vmem:[%s1 + $0x24] sm:$0x3]
    %v34 = vld [vmem:[%s2] sm:$0x1]
    %v36 = vlaneseq
    %v37 = vshrl.u32 %v36, 7
    %v38 = vsub.s32 0, %v37
    %v39 = vrot.slane %v34, %v38
    %v51 = vunpack.c.l.b16 %v24
    %v52 = vunpack.c.l.b16 %v25
    %v53 = vunpack.c.l.b16 %v26
    %v54 = vunpack.c.l.b16 %v27
    %v55 = vunpack.c.l.b16 %v28
    %v56 = vunpack.c.l.b16 %v29
    %v57 = vunpack.c.l.b16 %v30
    %v58 = vunpack.c.l.b16 %v31
    %v59 = vunpack.c.l.b16 %v32
    %v60 = vunpack.c.l.b16 %v33
    %v61 = vpack.c.b16 %v52, %v51
    %v62 = vpack.c.b16 %v54, %v53
    %v63 = vpack.c.b16 %v56, %v55
    %v64 = vpack.c.b16 %v58, %v57
    %v65 = vpack.c.b16 %v60, %v59
    %vm70 = vcmask 621568
    %v72 = vsel %vm70, %v23, 0
    %vm74 = vcmask 1045504
    %v76 = vsel %vm74, %v65, 0
    %78 = vmatprep.subr.bf16.mxu0 0
    %79 = vmatpush1.bf16.msra.mxu0 0
    %80 = vmatprep.subr.bf16.mxu0 0
    %81 = vmatpush1.bf16.msra.mxu0 0
    %82 = vmatprep.subr.bf16.mxu0 0
    %83 = vmatpush1.bf16.msra.mxu0 0
    %84 = vmatprep.subr.bf16.mxu0 0
    %85 = vmatpush1.bf16.msra.mxu0 %v76
    %86 = vmatprep.subr.bf16.mxu0 0
    %87 = vmatpush1.bf16.msra.mxu0 %v64
    %88 = vmatprep.subr.bf16.mxu0 0
    %89 = vmatpush1.bf16.msra.mxu0 %v63
    %90 = vmatprep.subr.bf16.mxu0 0
    %91 = vmatpush1.bf16.msra.mxu0 %v62
    %92 = vmatprep.subr.bf16.mxu0 0
    %93 = vmatpush1.bf16.msra.mxu0 %v61
    %94 = vmatprep.subr.bf16.mxu0 0
    %95 = vmatpush2.bf16.msra.mxu0 0
    %96 = vmatprep.subr.bf16.mxu0 0
    %97 = vmatpush2.bf16.msra.mxu0 0
    %98 = vmatprep.subr.bf16.mxu0 0
    %99 = vmatpush2.bf16.msra.mxu0 0
    %100 = vmatprep.subr.bf16.mxu0 0
    %101 = vmatpush2.bf16.msra.mxu0 0
    %102 = vmatprep.subr.bf16.mxu0 0
    %103 = vmatpush2.bf16.msra.mxu0 0
    %104 = vmatprep.subr.bf16.mxu0 0
    %105 = vmatpush2.bf16.msra.mxu0 0
    %106 = vmatprep.subr.bf16.mxu0 0
    %107 = vmatpush2.bf16.msra.mxu0 0
    %108 = vmatprep.subr.bf16.mxu0 0
    %109 = vmatpush2.bf16.msra.mxu0 0
    %110 = vmatprep.mubr.bf16.mxu0 0
    %111 = vmatmul.mubr.bf16.gmra.mxu0 %v72
    %v112 = vpop.f32.mrf.mxu0
    %v113 = vadd.f32 %v39, %v112
    %v114 = vpop.f32.mrf.mxu0
    %v115 = vpop.f32.mrf.mxu0
    %v116 = vpop.f32.mrf.mxu0
    %117 = vdwg.mxu0
    %v118 = vmax.f32 %v113, 0.0
    %v119 = vpack.c.bf16 %v118, %v118
    %v120 = vld [vmem:[%s3] sm:$0xf]
    %v121 = vld [vmem:[%s3 + $0x4] sm:$0xf]
    %v122 = vld [vmem:[%s3 + $0x8] sm:$0xf]
    %v123 = vld [vmem:[%s3 + $0xc] sm:$0xf]
    %v124 = vld [vmem:[%s4] sm:$0x1]
    %v126 = vlaneseq
    %v127 = vshrl.u32 %v126, 7
    %v128 = vsub.s32 0, %v127
    %v129 = vrot.slane %v124, %v128
    %v135 = vunpack.c.l.b16 %v120
    %v136 = vunpack.c.l.b16 %v121
    %v137 = vunpack.c.l.b16 %v122
    %v138 = vunpack.c.l.b16 %v123
    %v139 = vpack.c.b16 %v136, %v135
    %v140 = vpack.c.b16 %v138, %v137
    %vm143 = vcmask 261120
    %v145 = vsel %vm143, %v119, 0
    %147 = vmatprep.subr.bf16.mxu0 0
    %148 = vmatpush1.bf16.msra.mxu0 0
    %149 = vmatprep.subr.bf16.mxu0 0
    %150 = vmatpush1.bf16.msra.mxu0 0
    %151 = vmatprep.subr.bf16.mxu0 0
    %152 = vmatpush1.bf16.msra.mxu0 0
    %153 = vmatprep.subr.bf16.mxu0 0
    %154 = vmatpush1.bf16.msra.mxu0 0
    %155 = vmatprep.subr.bf16.mxu0 0
    %156 = vmatpush1.bf16.msra.mxu0 0
    %157 = vmatprep.subr.bf16.mxu0 0
    %158 = vmatpush1.bf16.msra.mxu0 0
    %159 = vmatprep.subr.bf16.mxu0 0
    %160 = vmatpush1.bf16.msra.mxu0 %v140
    %161 = vmatprep.subr.bf16.mxu0 0
    %162 = vmatpush1.bf16.msra.mxu0 %v139
    %163 = vmatprep.subr.bf16.mxu0 0
    %164 = vmatpush2.bf16.msra.mxu0 0
    %165 = vmatprep.subr.bf16.mxu0 0
    %166 = vmatpush2.bf16.msra.mxu0 0
    %167 = vmatprep.subr.bf16.mxu0 0
    %168 = vmatpush2.bf16.msra.mxu0 0
    %169 = vmatprep.subr.bf16.mxu0 0
    %170 = vmatpush2.bf16.msra.mxu0 0
    %171 = vmatprep.subr.bf16.mxu0 0
    %172 = vmatpush2.bf16.msra.mxu0 0
    %173 = vmatprep.subr.bf16.mxu0 0
    %174 = vmatpush2.bf16.msra.mxu0 0
    %175 = vmatprep.subr.bf16.mxu0 0
    %176 = vmatpush2.bf16.msra.mxu0 0
    %177 = vmatprep.subr.bf16.mxu0 0
    %178 = vmatpush2.bf16.msra.mxu0 0
    %179 = vmatprep.mubr.bf16.mxu0 0
    %180 = vmatmul.mubr.bf16.gmra.mxu0 %v145
    %v181 = vpop.f32.mrf.mxu0
    %v182 = vadd.f32 %v129, %v181
    %v183 = vpop.f32.mrf.mxu0
    %v184 = vpop.f32.mrf.mxu0
    %v185 = vpop.f32.mrf.mxu0
    %186 = vdwg.mxu0
    %vm187 = vcmask 80896
    %188 = vst.msk [vmem:[#allocation2] sm:$0xff] %vm187, %v182
    // Predicated region
    $region22: #{tpu_custom_call.1} parent=1 // pred_check
      _
    $region23: #{tpu_custom_call.1} parent=1 // pred_check_branch
      %190 = sbr.rel (0) target = $region25
    $region24: #{tpu_custom_call.1} parent=1 // pred_region
      %s192 = ssub.s32 128, 128
      %193 = vsyncadd [#allocation3], %s192
      %s195 = sshll.u32 [#allocation2], 4
      %s196 = int_to_ptr.vmem [resolvable:$true] %s195
      %198 = dma.vmem_to_hbm [thread:$0]  %s196, 128, %s5, [#allocation3]
    $region25: #{tpu_custom_call.1} parent=1 // pred_fallthru
      _
    // Predicated region
    $region26: #{tpu_custom_call.1} parent=1 // pred_check
      _
    $region27: #{tpu_custom_call.1} parent=1 // pred_check_branch
      %200 = sbr.rel (0) target = $region29
    $region28: #{tpu_custom_call.1} parent=1 // pred_region
      %201 = dma.done [#allocation3], 128
    $region29: #{tpu_custom_call.1} parent=1 // pred_fallthru
      _
    %202 = vsyncpa [#allocation3], 1

</llo_original>
